<compile_context>
chip_gen: v5e
topology: v5e:2x2
jax: 0.10.0
libtpu: 0.0.40
codegen_flags: <defaults>
</compile_context>

<pallas_src>
import numpy as np
import jax
import jax.numpy as jnp
from jax.experimental import pallas as pl
from jax.experimental.pallas import tpu as pltpu

FP = jnp.float32
BF = jnp.bfloat16
NEG_BIG = -1e30      # finite stand-in for masked_fill_(-inf); exp() underflows to exactly 0


# ------------------------------ Pallas kernel --------------------------------
def _make_kernel(scale):
    scale = 1.0 if scale is None else float(scale)

    def kernel(q_ref, k_ref, v_ref, bias_ref, ctx_ref, attn_ref):
        q = q_ref[...].astype(BF)                       # [bg, Lq, D]
        k = k_ref[...].astype(BF)                       # [bg, Lk, D]
        # attention = bmm(q, k^T) * scale  + additive mask (== masked_fill_(-inf))
        s = jnp.einsum('bqd,bkd->bqk', q, k, preferred_element_type=jnp.float32)
        s = s * scale + bias_ref[...]
        # softmax(dim=2); Dropout(p=0.0) is an identity so it is omitted
        s = s - jnp.max(s, axis=-1, keepdims=True)
        p = jnp.exp(s)
        p = p / jnp.sum(p, axis=-1, keepdims=True)
        attn_ref[...] = p.astype(attn_ref.dtype)
        # context = bmm(attention, v)
        ctx_ref[...] = jnp.einsum('bqk,bkd->bqd', p.astype(BF), v_ref[...].astype(BF),
                                  preferred_element_type=jnp.float32).astype(ctx_ref.dtype)

    return kernel


# ------------------------------ wrapper ---------------------------------------
def scaled_dot_product_attention(q, k, v, scale=None, attn_mask=None, *, block_g=4):
    """Pallas TPU ScaledDotProductAttention.forward.

    q: [G, Lq, D], k/v: [G, Lk, D], attn_mask: bool [G, Lq, Lk] (True = masked).
    Returns (context [G, Lq, D] f32, attention [G, Lq, Lk] f32).
    """
    g, lq, d = q.shape
    lk = k.shape[1]
    assert k.shape == (g, lk, d) and v.shape == (g, lk, d)
    if g % block_g != 0:
        block_g = 1

    # additive mask precomputed outside the kernel (0 where valid, NEG_BIG where masked)
    if attn_mask is None:
        bias = jnp.zeros((g, lq, lk), FP)
    else:
        bias = jnp.where(attn_mask, NEG_BIG, 0.0).astype(FP)

    grid = (g // block_g,)
    qkv_spec = lambda ln: pl.BlockSpec((block_g, ln, d), lambda b: (b, 0, 0))
    mat_spec = pl.BlockSpec((block_g, lq, lk), lambda b: (b, 0, 0))

    bytes_accessed = 4 * (2 * g * lq * d + 2 * g * lk * d + 2 * g * lq * lk)
    cost = pl.CostEstimate(flops=4 * g * lq * lk * d,
                           transcendentals=g * lq * lk,
                           bytes_accessed=bytes_accessed)

    ctx, attn = pl.pallas_call(
        _make_kernel(scale),
        out_shape=(jax.ShapeDtypeStruct((g, lq, d), FP),
                   jax.ShapeDtypeStruct((g, lq, lk), FP)),
        grid=grid,
        in_specs=[qkv_spec(lq), qkv_spec(lk), qkv_spec(lk), mat_spec],
        out_specs=(qkv_spec(lq), mat_spec),
        compiler_params=pltpu.CompilerParams(
            dimension_semantics=("parallel",),          # shards across v7x's 2 TCs
            vmem_limit_bytes=16 * 1024 * 1024),
        cost_estimate=cost,
    )(q, k, v, bias)
    return ctx, attn


# ------------------------- pure-JAX reference (check) ------------------------
def sdpa_reference(q, k, v, scale=None, attn_mask=None):
    # mirrors the kernel's bf16-input / f32-accumulate MXU path
    s = jnp.einsum('bqd,bkd->bqk', q.astype(BF), k.astype(BF),
                   preferred_element_type=jnp.float32)
    if scale:
        s = s * scale
    if attn_mask is not None:
        s = jnp.where(attn_mask, -jnp.inf, s)           # torch masked_fill_(-inf)
    p = jax.nn.softmax(s, axis=2)                       # nn.Softmax(dim=2); dropout p=0
    ctx = jnp.einsum('bqk,bkd->bqd', p.astype(BF), v.astype(BF),
                     preferred_element_type=jnp.float32)
    return ctx, p


# ----------------------------------- main ------------------------------------
if __name__ == "__main__":
    G, LQ, LK, D = 8, 8, 8, 128            # bmm batch (e.g. 2 batches x 4 heads), seq 8, head dim 128
    SCALE = float(D) ** (-0.5)

    key = jax.random.PRNGKey(0)
    kq, kk, kv, kl = jax.random.split(key, 4)
    q = jax.random.uniform(kq, (G, LQ, D), FP, -1.0, 1.0)
    k = jax.random.uniform(kk, (G, LK, D), FP, -1.0, 1.0)
    v = jax.random.uniform(kv, (G, LK, D), FP, -1.0, 1.0)
    # padding-style key mask; every query row keeps at least 3 valid keys (no NaN rows)
    key_len = jax.random.randint(kl, (G,), 3, LK + 1)
    attn_mask = jnp.broadcast_to(
        jnp.arange(LK)[None, None, :] >= key_len[:, None, None], (G, LQ, LK))

    fwd = jax.jit(lambda q, k, v, m: scaled_dot_product_attention(
        q, k, v, scale=SCALE, attn_mask=m))
    ctx, attn = fwd(q, k, v, attn_mask)
    ctx, attn = jax.block_until_ready((ctx, attn))

    ref_ctx, ref_attn = sdpa_reference(q, k, v, scale=SCALE, attn_mask=attn_mask)
    ref_ctx, ref_attn = jax.block_until_ready((ref_ctx, ref_attn))

    assert ctx.shape == (G, LQ, D) and attn.shape == (G, LQ, LK)
    assert bool(jnp.all(jnp.isfinite(ctx))) and bool(jnp.all(jnp.isfinite(attn)))
    np.testing.assert_allclose(np.asarray(attn), np.asarray(ref_attn), rtol=2e-3, atol=2e-3)
    np.testing.assert_allclose(np.asarray(ctx), np.asarray(ref_ctx), rtol=2e-3, atol=2e-3)
    print("KERNEL_OK")
</pallas_src>

<mosaic_0001>
module attributes {stable_mosaic.version = 11 : i64} {
  func.func @kernel(%arg0: i32, %arg1: memref<4x8x128xf32, #tpu.memory_space<vmem>>, %arg2: memref<4x8x128xf32, #tpu.memory_space<vmem>>, %arg3: memref<4x8x128xf32, #tpu.memory_space<vmem>>, %arg4: memref<4x8x8xf32, #tpu.memory_space<vmem>>, %arg5: memref<4x8x128xf32, #tpu.memory_space<vmem>>, %arg6: memref<4x8x8xf32, #tpu.memory_space<vmem>>) attributes {dimension_semantics = [#tpu.dimension_semantics<parallel>], iteration_bounds = array<i64: 2>, scalar_prefetch = 0 : i64, scratch_operands = 0 : i64, tpu.core_type = #tpu.core_type<tc>, window_params = [{transform_indices = @transform_0, window_bounds = array<i64: 4, 8, 128>}, {transform_indices = @transform_1, window_bounds = array<i64: 4, 8, 128>}, {transform_indices = @transform_2, window_bounds = array<i64: 4, 8, 128>}, {transform_indices = @transform_3, window_bounds = array<i64: 4, 8, 8>}, {transform_indices = @transform_4, window_bounds = array<i64: 4, 8, 128>}, {transform_indices = @transform_5, window_bounds = array<i64: 4, 8, 8>}]} {
    %c0 = arith.constant 0 : index
    %c0_0 = arith.constant 0 : index
    %c0_1 = arith.constant 0 : index
    %0 = vector.load %arg1[%c0, %c0_0, %c0_1] : memref<4x8x128xf32, #tpu.memory_space<vmem>>, vector<4x8x128xf32>
    %1 = arith.truncf %0 : vector<4x8x128xf32> to vector<4x8x128xbf16>
    %c0_2 = arith.constant 0 : index
    %c0_3 = arith.constant 0 : index
    %c0_4 = arith.constant 0 : index
    %2 = vector.load %arg2[%c0_2, %c0_3, %c0_4] : memref<4x8x128xf32, #tpu.memory_space<vmem>>, vector<4x8x128xf32>
    %3 = arith.truncf %2 : vector<4x8x128xf32> to vector<4x8x128xbf16>
    "tpu.trace_start"() <{level = 10 : i32, message = "bqd,bkd->bqk"}> : () -> ()
    %cst = arith.constant dense<0.000000e+00> : vector<4x8x8xf32>
    %4 = tpu.matmul %1, %3, %cst {dimension_numbers = #tpu.dot_dimension_numbers<[2], [2], [1], [1], [0, 0, 0, 1, 1, 1], [0], [0]>} : vector<4x8x128xbf16>, vector<4x8x128xbf16>, vector<4x8x8xf32> -> vector<4x8x8xf32>
    "tpu.trace_stop"() : () -> ()
    %cst_5 = arith.constant 0.0883883461 : f32
    %5 = vector.broadcast %cst_5 : f32 to vector<4x8x8xf32>
    %6 = arith.mulf %4, %5 : vector<4x8x8xf32>
    %c0_6 = arith.constant 0 : index
    %c0_7 = arith.constant 0 : index
    %c0_8 = arith.constant 0 : index
    %7 = vector.load %arg4[%c0_6, %c0_7, %c0_8] : memref<4x8x8xf32, #tpu.memory_space<vmem>>, vector<4x8x8xf32>
    %8 = arith.addf %6, %7 : vector<4x8x8xf32>
    %cst_9 = arith.constant dense<0xFF800000> : vector<4x8xf32>
    %9 = vector.multi_reduction <maximumf>, %8, %cst_9 [2] : vector<4x8x8xf32> to vector<4x8xf32>
    %10 = vector.shape_cast %9 : vector<4x8xf32> to vector<4x8x1xf32>
    %11 = vector.broadcast %10 : vector<4x8x1xf32> to vector<4x8x8xf32>
    %12 = arith.subf %8, %11 : vector<4x8x8xf32>
    %13 = math.exp %12 : vector<4x8x8xf32>
    %cst_10 = arith.constant dense<0.000000e+00> : vector<4x8xf32>
    %14 = vector.multi_reduction <add>, %13, %cst_10 [2] : vector<4x8x8xf32> to vector<4x8xf32>
    %15 = vector.shape_cast %14 : vector<4x8xf32> to vector<4x8x1xf32>
    %16 = vector.broadcast %15 : vector<4x8x1xf32> to vector<4x8x8xf32>
    %17 = arith.divf %13, %16 : vector<4x8x8xf32>
    %c0_11 = arith.constant 0 : index
    %c0_12 = arith.constant 0 : index
    %c0_13 = arith.constant 0 : index
    %18 = vector.load %arg6[%c0_11, %c0_12, %c0_13] : memref<4x8x8xf32, #tpu.memory_space<vmem>>, vector<4x8x8xf32>
    tpu.vector_store %arg6[%c0_11, %c0_12, %c0_13], %17 {strides = array<i32>} : memref<4x8x8xf32, #tpu.memory_space<vmem>>, vector<4x8x8xf32>,
    %19 = arith.truncf %17 : vector<4x8x8xf32> to vector<4x8x8xbf16>
    %c0_14 = arith.constant 0 : index
    %c0_15 = arith.constant 0 : index
    %c0_16 = arith.constant 0 : index
    %20 = vector.load %arg3[%c0_14, %c0_15, %c0_16] : memref<4x8x128xf32, #tpu.memory_space<vmem>>, vector<4x8x128xf32>
    %21 = arith.truncf %20 : vector<4x8x128xf32> to vector<4x8x128xbf16>
    "tpu.trace_start"() <{level = 10 : i32, message = "bqk,bkd->bqd"}> : () -> ()
    %cst_17 = arith.constant dense<0.000000e+00> : vector<4x8x128xf32>
    %22 = tpu.matmul %19, %21, %cst_17 {dimension_numbers = #tpu.dot_dimension_numbers<[2], [1], [1], [2], [0, 0, 0, 1, 1, 2], [0], [0]>} : vector<4x8x8xbf16>, vector<4x8x128xbf16>, vector<4x8x128xf32> -> vector<4x8x128xf32>
    "tpu.trace_stop"() : () -> ()
    %c0_18 = arith.constant 0 : index
    %c0_19 = arith.constant 0 : index
    %c0_20 = arith.constant 0 : index
    %23 = vector.load %arg5[%c0_18, %c0_19, %c0_20] : memref<4x8x128xf32, #tpu.memory_space<vmem>>, vector<4x8x128xf32>
    tpu.vector_store %arg5[%c0_18, %c0_19, %c0_20], %22 {strides = array<i32>} : memref<4x8x128xf32, #tpu.memory_space<vmem>>, vector<4x8x128xf32>,
    return
  }
  func.func @transform_0(%arg0: i32) -> (i32, i32, i32) {
    %c0_i32 = arith.constant 0 : i32
    %c0_i32_0 = arith.constant 0 : i32
    %c0_i32_1 = arith.constant 0 : i32
    return %arg0, %c0_i32, %c0_i32_0 : i32, i32, i32
  }
  func.func @transform_1(%arg0: i32) -> (i32, i32, i32) {
    %c0_i32 = arith.constant 0 : i32
    %c0_i32_0 = arith.constant 0 : i32
    %c0_i32_1 = arith.constant 0 : i32
    return %arg0, %c0_i32, %c0_i32_0 : i32, i32, i32
  }
  func.func @transform_2(%arg0: i32) -> (i32, i32, i32) {
    %c0_i32 = arith.constant 0 : i32
    %c0_i32_0 = arith.constant 0 : i32
    %c0_i32_1 = arith.constant 0 : i32
    return %arg0, %c0_i32, %c0_i32_0 : i32, i32, i32
  }
  func.func @transform_3(%arg0: i32) -> (i32, i32, i32) {
    %c0_i32 = arith.constant 0 : i32
    %c0_i32_0 = arith.constant 0 : i32
    %c0_i32_1 = arith.constant 0 : i32
    return %arg0, %c0_i32, %c0_i32_0 : i32, i32, i32
  }
  func.func @transform_4(%arg0: i32) -> (i32, i32, i32) {
    %c0_i32 = arith.constant 0 : i32
    %c0_i32_0 = arith.constant 0 : i32
    %c0_i32_1 = arith.constant 0 : i32
    return %arg0, %c0_i32, %c0_i32_0 : i32, i32, i32
  }
  func.func @transform_5(%arg0: i32) -> (i32, i32, i32) {
    %c0_i32 = arith.constant 0 : i32
    %c0_i32_0 = arith.constant 0 : i32
    %c0_i32_1 = arith.constant 0 : i32
    return %arg0, %c0_i32, %c0_i32_0 : i32, i32, i32
  }
}

</mosaic_0001>

<llo_original>
// kernel: _lambda_.1
$region0: #{_lambda_.1}
  #allocation0 [shape = 'u32[]', space=smem, size = 0x4, offset = 0x4, fixed_abs, tag = 'smem constant byte address 0x4 - core index']
  #allocation1 [shape = 'u32[72,128]{1,0:T(1,128)}', space=vmem, size = 0x9000, scoped, tag = 'internal scratch']
  %s0 = inlined_call_operand.vmem [shape: f32[8,8,128], index: 0, kind: input, shape index: {}]
  %s1 = inlined_call_operand.hbm [shape: f32[8,8,128], index: 1, kind: input, shape index: {}]
  %s2 = inlined_call_operand.hbm [shape: f32[8,8,128], index: 2, kind: input, shape index: {}]
  %s3 = inlined_call_operand.vmem [shape: f32[8,8,8], index: 3, kind: input, shape index: {}]
  %s4 = inlined_call_operand.hbm [shape: f32[8,8,128], index: 4, kind: output, shape index: {0}]
  %s5 = inlined_call_operand.hbm [shape: f32[8,8,8], index: 5, kind: output, shape index: {1}]
  %6 = xla_tuple %s4, %s5
  %s7 = sld [smem:[#allocation0]]
  $region65: #{_lambda_.1} parent=0
    _
  %s9 = ssub.s32 1, %s7
  %s10 = scalar_select 0, %s9, %s7
  $region1: #{_lambda_.1} parent=0
    #allocation2 [shape = 'u8[32768]{0}', space=vmem, size = 0x8000, scoped, tag = 'input window, operand 1']
    #allocation3 [shape = 's32[2]{0}', space=sflag, size = 0x8, scoped, tag = 'scoped memory for _lambda_.1']
    #allocation4 [shape = 's32[2]{0}', space=sflag, size = 0x8, scoped, tag = 'scoped memory for _lambda_.1']
    #allocation5 [shape = 'u8[32768]{0}', space=vmem, size = 0x8000, scoped, tag = 'input window, operand 2']
    #allocation6 [shape = 's32[2]{0}', space=sflag, size = 0x8, scoped, tag = 'scoped memory for _lambda_.1']
    #allocation7 [shape = 'u8[32768]{0}', space=vmem, size = 0x8000, scoped, tag = 'output window, operand 0']
    #allocation8 [shape = 'u8[32768]{0}', space=vmem, size = 0x8000, scoped, tag = 'output window, operand 1']
    #allocation9 [shape = 's32[2]{0}', space=sflag, size = 0x8, scoped, tag = 'scoped memory for _lambda_.1']
    %11 = vsyncpa [#allocation3], 0
    %s12 = scalar_lea.sflag [#allocation3], 1
    %13 = vsyncpa %s12, 0
    %14 = vsyncpa [#allocation6], 0
    %s15 = scalar_lea.sflag [#allocation6], 1
    %16 = vsyncpa %s15, 0
    %17 = vsyncpa [#allocation4], 0
    %s18 = scalar_lea.sflag [#allocation4], 1
    %19 = vsyncpa %s18, 0
    %20 = vsyncpa [#allocation9], 0
    %s21 = scalar_lea.sflag [#allocation9], 1
    %22 = vsyncpa %s21, 0
    loop: start=0, step=1, limit=4
    $region2: #{_lambda_.1} parent=1 // loop_pre_header
      _
    $region3: #{_lambda_.1} parent=1 // loop_header
      %s24 = sphi 0, %s28
      %p25 = scmp.ge.s32.totalorder %s24, 4
      %s34 = sphi 0, %s36
      %s37 = sphi 0, %s34
      %s38 = sphi 0, %s37
      %s54 = sphi 0, %s38
      %s60 = sphi 0, %s62
      %s63 = sphi 0, %s60
      %s64 = sphi 0, %s63
      %s80 = sphi 0, %s64
      %s86 = sphi 0, %s88
      %s89 = sphi 0, %s86
      %s90 = sphi 0, %s89
      %s106 = sphi 0, %s90
      %s112 = sphi 0, %s114
      %s115 = sphi 0, %s112
      %s116 = sphi 0, %s115
      %s132 = sphi 0, %s116
      %s138 = sphi 0, %s140
      %s141 = sphi 0, %s138
      %s142 = sphi 0, %s141
      %s158 = sphi 0, %s142
      %s164 = sphi 0, %s166
      %s167 = sphi 0, %s164
      %s168 = sphi 0, %s167
      %s184 = sphi 0, %s168
    $region4: #{_lambda_.1} parent=1 // loop_header_branch
      %27 = sbr.rel (%p25) target = $region8
    $region5: #{_lambda_.1} parent=1 // loop_body
      %s29 = ssub.s32 %s24, 1
      %s30 = ssub.s32 %s24, 2
      %s31 = sadd.s32 %s24, 1
      %s32 = ssub.s32 %s24, %s31
      %p33 = scmp.eq.s32.totalorder %s32, 0
      %s35 = sadd.s32 %s34, 1
      %s36 = scalar_select %p33, %s34, %s35
      %p39 = pneg %p33
      %p40 = scmp.eq.s32.totalorder %s24, 1
      %p41 = por %p39, %p40
      %p42 = scmp.ne.s32.totalorder %s34, %s37
      %p43 = scmp.eq.s32.totalorder %s24, 0
      %p44 = por %p42, %p43
      %p45 = scmp.ne.s32.totalorder %s34, %s37
      %p46 = scmp.eq.s32.totalorder %s29, 1
      %p47 = por %p45, %p46
      %p48 = scmp.ne.s32.totalorder %s37, %s38
      %p49 = scmp.eq.s32.totalorder %s29, 0
      %p50 = por %p48, %p49
      %p51 = scmp.ne.s32.totalorder %s37, %s38
      %p52 = scmp.eq.s32.totalorder %s30, 1
      %p53 = por %p51, %p52
      %p55 = scmp.ne.s32.totalorder %s38, %s54
      %p56 = scmp.eq.s32.totalorder %s30, 0
      %p57 = por %p55, %p56
      %s58 = ssub.s32 %s24, %s31
      %p59 = scmp.eq.s32.totalorder %s58, 0
      %s61 = sadd.s32 %s60, 1
      %s62 = scalar_select %p59, %s60, %s61
      %p65 = pneg %p59
      %p66 = scmp.eq.s32.totalorder %s24, 1
      %p67 = por %p65, %p66
      %p68 = scmp.ne.s32.totalorder %s60, %s63
      %p69 = scmp.eq.s32.totalorder %s24, 0
      %p70 = por %p68, %p69
      %p71 = scmp.ne.s32.totalorder %s60, %s63
      %p72 = scmp.eq.s32.totalorder %s29, 1
      %p73 = por %p71, %p72
      %p74 = scmp.ne.s32.totalorder %s63, %s64
      %p75 = scmp.eq.s32.totalorder %s29, 0
      %p76 = por %p74, %p75
      %p77 = scmp.ne.s32.totalorder %s63, %s64
      %p78 = scmp.eq.s32.totalorder %s30, 1
      %p79 = por %p77, %p78
      %p81 = scmp.ne.s32.totalorder %s64, %s80
      %p82 = scmp.eq.s32.totalorder %s30, 0
      %p83 = por %p81, %p82
      %s84 = ssub.s32 %s24, %s31
      %p85 = scmp.eq.s32.totalorder %s84, 0
      %s87 = sadd.s32 %s86, 1
      %s88 = scalar_select %p85, %s86, %s87
      %p91 = pneg %p85
      %p92 = scmp.eq.s32.totalorder %s24, 1
      %p93 = por %p91, %p92
      %p94 = scmp.ne.s32.totalorder %s86, %s89
      %p95 = scmp.eq.s32.totalorder %s24, 0
      %p96 = por %p94, %p95
      %p97 = scmp.ne.s32.totalorder %s86, %s89
      %p98 = scmp.eq.s32.totalorder %s29, 1
      %p99 = por %p97, %p98
      %p100 = scmp.ne.s32.totalorder %s89, %s90
      %p101 = scmp.eq.s32.totalorder %s29, 0
      %p102 = por %p100, %p101
      %p103 = scmp.ne.s32.totalorder %s89, %s90
      %p104 = scmp.eq.s32.totalorder %s30, 1
      %p105 = por %p103, %p104
      %p107 = scmp.ne.s32.totalorder %s90, %s106
      %p108 = scmp.eq.s32.totalorder %s30, 0
      %p109 = por %p107, %p108
      %s110 = ssub.s32 %s24, %s31
      %p111 = scmp.eq.s32.totalorder %s110, 0
      %s113 = sadd.s32 %s112, 1
      %s114 = scalar_select %p111, %s112, %s113
      %p117 = pneg %p111
      %p118 = scmp.eq.s32.totalorder %s24, 1
      %p119 = por %p117, %p118
      %p120 = scmp.ne.s32.totalorder %s112, %s115
      %p121 = scmp.eq.s32.totalorder %s24, 0
      %p122 = por %p120, %p121
      %p123 = scmp.ne.s32.totalorder %s112, %s115
      %p124 = scmp.eq.s32.totalorder %s29, 1
      %p125 = por %p123, %p124
      %p126 = scmp.ne.s32.totalorder %s115, %s116
      %p127 = scmp.eq.s32.totalorder %s29, 0
      %p128 = por %p126, %p127
      %p129 = scmp.ne.s32.totalorder %s115, %s116
      %p130 = scmp.eq.s32.totalorder %s30, 1
      %p131 = por %p129, %p130
      %p133 = scmp.ne.s32.totalorder %s116, %s132
      %p134 = scmp.eq.s32.totalorder %s30, 0
      %p135 = por %p133, %p134
      %s136 = ssub.s32 %s24, %s31
      %p137 = scmp.eq.s32.totalorder %s136, 0
      %s139 = sadd.s32 %s138, 1
      %s140 = scalar_select %p137, %s138, %s139
      %p143 = pneg %p137
      %p144 = scmp.eq.s32.totalorder %s24, 1
      %p145 = por %p143, %p144
      %p146 = scmp.ne.s32.totalorder %s138, %s141
      %p147 = scmp.eq.s32.totalorder %s24, 0
      %p148 = por %p146, %p147
      %p149 = scmp.ne.s32.totalorder %s138, %s141
      %p150 = scmp.eq.s32.totalorder %s29, 1
      %p151 = por %p149, %p150
      %p152 = scmp.ne.s32.totalorder %s141, %s142
      %p153 = scmp.eq.s32.totalorder %s29, 0
      %p154 = por %p152, %p153
      %p155 = scmp.ne.s32.totalorder %s141, %s142
      %p156 = scmp.eq.s32.totalorder %s30, 1
      %p157 = por %p155, %p156
      %p159 = scmp.ne.s32.totalorder %s142, %s158
      %p160 = scmp.eq.s32.totalorder %s30, 0
      %p161 = por %p159, %p160
      %s162 = ssub.s32 %s24, %s31
      %p163 = scmp.eq.s32.totalorder %s162, 0
      %s165 = sadd.s32 %s164, 1
      %s166 = scalar_select %p163, %s164, %s165
      %p169 = pneg %p163
      %p170 = scmp.eq.s32.totalorder %s24, 1
      %p171 = por %p169, %p170
      %p172 = scmp.ne.s32.totalorder %s164, %s167
      %p173 = scmp.eq.s32.totalorder %s24, 0
      %p174 = por %p172, %p173
      %p175 = scmp.ne.s32.totalorder %s164, %s167
      %p176 = scmp.eq.s32.totalorder %s29, 1
      %p177 = por %p175, %p176
      %p178 = scmp.ne.s32.totalorder %s167, %s168
      %p179 = scmp.eq.s32.totalorder %s29, 0
      %p180 = por %p178, %p179
      %p181 = scmp.ne.s32.totalorder %s167, %s168
      %p182 = scmp.eq.s32.totalorder %s30, 1
      %p183 = por %p181, %p182
      %p185 = scmp.ne.s32.totalorder %s168, %s184
      %p186 = scmp.eq.s32.totalorder %s30, 0
      %p187 = por %p185, %p186
      %p188 = scmp.le.s32.totalorder 1, %s24
      %p189 = scmp.lt.s32.totalorder %s24, 3
      %p190 = pnand %p188, %p189
      %p191 = pneg %p190
      // Predicated region
      $region9: #{_lambda_.1} parent=5 // pred_check
        _
      $region10: #{_lambda_.1} parent=5 // pred_check_branch
        %193 = sbr.rel (%p190) target = $region12
      $region11: #{_lambda_.1} parent=5 // pred_region
        %s194 = ssub.s32 %s24, 1
      $region12: #{_lambda_.1} parent=5 // pred_fallthru
        _
      %p195 = scmp.lt.s32.totalorder %s24, 2
      // Predicated region
      $region13: #{_lambda_.1} parent=5 // pred_check
        %p196 = pneg %p195
      $region14: #{_lambda_.1} parent=5 // pred_check_branch
        %198 = sbr.rel (%p196) target = $region16
      $region15: #{_lambda_.1} parent=5 // pred_region
        // Predicated region
        $region17: #{_lambda_.1} parent=15 // pred_check
          %p199 = pneg %p44
        $region18: #{_lambda_.1} parent=15 // pred_check_branch
          %201 = sbr.rel (%p199) target = $region20
        $region19: #{_lambda_.1} parent=15 // pred_region
          %s202 = smul.u32 4, %s24
          %p203 = scmp.lt.s32.totalorder %s202, 7
          %s204 = scalar_select %p203, %s202, 7
          %s205 = smul.addr %s204, 8
          %s206 = scalar_lea.vmem %s0, %s205
          %s207 = smul.u32 4, %s24
        $region20: #{_lambda_.1} parent=15 // pred_fallthru
          _
        // Predicated region
        $region21: #{_lambda_.1} parent=15 // pred_check
          %p208 = pneg %p70
        $region22: #{_lambda_.1} parent=15 // pred_check_branch
          %210 = sbr.rel (%p208) target = $region24
        $region23: #{_lambda_.1} parent=15 // pred_region
          %s211 = sand.u32 %s60, 1
          %s212 = scalar_lea.sflag [#allocation3], %s211
          %s213 = sand.u32 %s60, 1
          %s214 = smul.addr %s213, 32
          %s215 = scalar_lea.vmem [#allocation2], %s214
          %s216 = smul.u32 4, %s24
          %218 = vsyncadd %s212, 0
          %s219 = smul.addr %s216, 8
          %s220 = scalar_lea.hbm %s1, %s219
          %s221 = sshll.u32 %s220, 4
          %s222 = int_to_ptr.hbm [resolvable:$true] %s221
          %s223 = sshll.u32 %s215, 4
          %s224 = int_to_ptr.vmem [resolvable:$true] %s223
          %229 = dma.hbm_to_vmem [thread:$0]  %s222, 512, %s224, %s212, 128, 128, 8
        $region24: #{_lambda_.1} parent=15 // pred_fallthru
          _
        // Predicated region
        $region25: #{_lambda_.1} parent=15 // pred_check
          %p230 = pneg %p96
        $region26: #{_lambda_.1} parent=15 // pred_check_branch
          %232 = sbr.rel (%p230) target = $region28
        $region27: #{_lambda_.1} parent=15 // pred_region
          %s233 = sand.u32 %s86, 1
          %s234 = scalar_lea.sflag [#allocation6], %s233
          %s235 = sand.u32 %s86, 1
          %s236 = smul.addr %s235, 32
          %s237 = scalar_lea.vmem [#allocation5], %s236
          %s238 = smul.u32 4, %s24
          %240 = vsyncadd %s234, 0
          %s241 = smul.addr %s238, 8
          %s242 = scalar_lea.hbm %s2, %s241
          %s243 = sshll.u32 %s242, 4
          %s244 = int_to_ptr.hbm [resolvable:$true] %s243
          %s245 = sshll.u32 %s237, 4
          %s246 = int_to_ptr.vmem [resolvable:$true] %s245
          %251 = dma.hbm_to_vmem [thread:$0]  %s244, 512, %s246, %s234, 128, 128, 8
        $region28: #{_lambda_.1} parent=15 // pred_fallthru
          _
        // Predicated region
        $region29: #{_lambda_.1} parent=15 // pred_check
          %p252 = pneg %p122
        $region30: #{_lambda_.1} parent=15 // pred_check_branch
          %254 = sbr.rel (%p252) target = $region32
        $region31: #{_lambda_.1} parent=15 // pred_region
          %s255 = smul.u32 4, %s24
          %p256 = scmp.lt.s32.totalorder %s255, 7
          %s257 = scalar_select %p256, %s255, 7
          %s258 = smul.addr %s257, 8
          %s259 = scalar_lea.vmem %s3, %s258
          %s260 = smul.u32 4, %s24
        $region32: #{_lambda_.1} parent=15 // pred_fallthru
          _
      $region16: #{_lambda_.1} parent=5 // pred_fallthru
        _
      %p261 = scmp.le.s32.totalorder 1, %s24
      %p262 = scmp.lt.s32.totalorder %s24, 3
      %p263 = pnand %p261, %p262
      %p264 = pneg %p263
      // Predicated region
      $region33: #{_lambda_.1} parent=5 // pred_check
        _
      $region34: #{_lambda_.1} parent=5 // pred_check_branch
        %266 = sbr.rel (%p263) target = $region36
      $region35: #{_lambda_.1} parent=5 // pred_region
        %s267 = ssub.s32 %s24, 1
        %s268 = sand.u32 %s63, 1
        %s269 = scalar_lea.sflag [#allocation3], %s268
        %s270 = sand.u32 %s63, 1
        %s271 = smul.addr %s270, 32
        %s272 = scalar_lea.vmem [#allocation2], %s271
        // Predicated region
        $region37: #{_lambda_.1} parent=35 // pred_check
          %p273 = pneg %p76
        $region38: #{_lambda_.1} parent=35 // pred_check_branch
          %275 = sbr.rel (%p273) target = $region40
        $region39: #{_lambda_.1} parent=35 // pred_region
          %277 = dma.done %s269, 512
        $region40: #{_lambda_.1} parent=35 // pred_fallthru
          _
        %s278 = sand.u32 %s89, 1
        %s279 = scalar_lea.sflag [#allocation6], %s278
        %s280 = sand.u32 %s89, 1
        %s281 = smul.addr %s280, 32
        %s282 = scalar_lea.vmem [#allocation5], %s281
        // Predicated region
        $region41: #{_lambda_.1} parent=35 // pred_check
          %p283 = pneg %p102
        $region42: #{_lambda_.1} parent=35 // pred_check_branch
          %285 = sbr.rel (%p283) target = $region44
        $region43: #{_lambda_.1} parent=35 // pred_region
          %287 = dma.done %s279, 512
        $region44: #{_lambda_.1} parent=35 // pred_fallthru
          _
        %s288 = smul.u32 4, %s29
        %p289 = scmp.lt.s32.totalorder %s288, 7
        %s290 = scalar_select %p289, %s288, 7
        %s291 = smul.addr %s290, 8
        %s292 = scalar_lea.vmem %s0, %s291
        %p293 = pneg %p50
        %p294 = pneg %p47
        %s295 = sand.u32 %s63, 1
        %s296 = scalar_lea.sflag [#allocation3], %s295
        %s297 = sand.u32 %s63, 1
        %s298 = smul.addr %s297, 32
        %s299 = scalar_lea.vmem [#allocation2], %s298
        %p300 = pneg %p76
        %p301 = pneg %p73
        %s302 = sand.u32 %s89, 1
        %s303 = scalar_lea.sflag [#allocation6], %s302
        %s304 = sand.u32 %s89, 1
        %s305 = smul.addr %s304, 32
        %s306 = scalar_lea.vmem [#allocation5], %s305
        %p307 = pneg %p102
        %p308 = pneg %p99
        %s309 = smul.u32 4, %s29
        %p310 = scmp.lt.s32.totalorder %s309, 7
        %s311 = scalar_select %p310, %s309, 7
        %s312 = smul.addr %s311, 8
        %s313 = scalar_lea.vmem %s3, %s312
        %p314 = pneg %p128
        %p315 = pneg %p125
        %p316 = pneg %p154
        %p317 = pneg %p151
        %s318 = sand.u32 %s141, 1
        %s319 = scalar_lea.sflag [#allocation4], %s318
        %s320 = sand.u32 %s141, 1
        %s321 = smul.addr %s320, 32
        %s322 = scalar_lea.vmem [#allocation7], %s321
        %p323 = pneg %p180
        %p324 = pneg %p177
        %s325 = sand.u32 %s167, 1
        %s326 = scalar_lea.sflag [#allocation9], %s325
        %s327 = sand.u32 %s167, 1
        %s328 = smul.addr %s327, 32
        %s329 = scalar_lea.vmem [#allocation8], %s328
        %s330 = smul.u32 4, %s29
        %p331 = scmp.lt.s32.totalorder %s330, 7
        %s332 = scalar_select %p331, %s330, 7
        %s333 = smul.addr %s332, 8
        %s334 = scalar_lea.vmem %s0, %s333
        %s335 = smul.u32 4, %s29
        %s336 = smul.u32 4, %s29
        %s337 = smul.u32 4, %s29
        %s338 = smul.u32 4, %s29
        %p339 = scmp.lt.s32.totalorder %s338, 7
        %s340 = scalar_select %p339, %s338, 7
        %s341 = smul.addr %s340, 8
        %s342 = scalar_lea.vmem %s3, %s341
        %s343 = smul.u32 4, %s29
        %s344 = smul.u32 4, %s29
        %s345 = smul.u32 4, %s29
        %v347 = vld [vmem:[%s334] sm:$0xff]
        %v348 = vld [vmem:[%s334 + $0x8] sm:$0xff]
        %v349 = vld [vmem:[%s334 + $0x10] sm:$0xff]
        %v350 = vld [vmem:[%s334 + $0x18] sm:$0xff]
        %v351 = vpack.c.bf16 %v347, %v347
        %v352 = vpack.c.bf16 %v348, %v348
        %v353 = vpack.c.bf16 %v349, %v349
        %v354 = vpack.c.bf16 %v350, %v350
        %v355 = vld [vmem:[%s272] sm:$0xff]
        %v356 = vld [vmem:[%s272 + $0x8] sm:$0xff]
        %v357 = vld [vmem:[%s272 + $0x10] sm:$0xff]
        %v358 = vld [vmem:[%s272 + $0x18] sm:$0xff]
        %v359 = vpack.c.bf16 %v355, %v355
        %v360 = vpack.c.bf16 %v356, %v356
        %v361 = vpack.c.bf16 %v357, %v357
        %v362 = vpack.c.bf16 %v358, %v358
        %363 = vmatpush.bf16.xpose.msra.mxu0 0
        %364 = vmatpush.bf16.xpose.msra.mxu0 0
        %365 = vmatpush.bf16.xpose.msra.mxu0 0
        %366 = vmatpush.bf16.xpose.msra.mxu0 0
        %367 = vmatpush.bf16.xpose.msra.mxu0 0
        %368 = vmatpush.bf16.xpose.msra.mxu0 0
        %369 = vmatpush.bf16.xpose.msra.mxu0 0
        %370 = vmatpush.bf16.xpose.msra.mxu0 %v359
        %371 = vmatmul.bf16.gmra.mxu0 %v351
        %v372 = vpop.f32.mrf.mxu0
        %v373 = vadd.f32 0.0, %v372
        %v374 = vpop.f32.mrf.mxu0
        %375 = vdwg.mxu0
        %376 = vmatpush.bf16.xpose.msra.mxu0 0
        %377 = vmatpush.bf16.xpose.msra.mxu0 0
        %378 = vmatpush.bf16.xpose.msra.mxu0 0
        %379 = vmatpush.bf16.xpose.msra.mxu0 0
        %380 = vmatpush.bf16.xpose.msra.mxu0 0
        %381 = vmatpush.bf16.xpose.msra.mxu0 0
        %382 = vmatpush.bf16.xpose.msra.mxu0 0
        %383 = vmatpush.bf16.xpose.msra.mxu0 %v360
        %384 = vmatmul.bf16.gmra.mxu0 %v352
        %v385 = vpop.f32.mrf.mxu0
        %v386 = vadd.f32 0.0, %v385
        %v387 = vpop.f32.mrf.mxu0
        %388 = vdwg.mxu0
        %389 = vmatpush.bf16.xpose.msra.mxu0 0
        %390 = vmatpush.bf16.xpose.msra.mxu0 0
        %391 = vmatpush.bf16.xpose.msra.mxu0 0
        %392 = vmatpush.bf16.xpose.msra.mxu0 0
        %393 = vmatpush.bf16.xpose.msra.mxu0 0
        %394 = vmatpush.bf16.xpose.msra.mxu0 0
        %395 = vmatpush.bf16.xpose.msra.mxu0 0
        %396 = vmatpush.bf16.xpose.msra.mxu0 %v361
        %397 = vmatmul.bf16.gmra.mxu0 %v353
        %v398 = vpop.f32.mrf.mxu0
        %v399 = vadd.f32 0.0, %v398
        %v400 = vpop.f32.mrf.mxu0
        %401 = vdwg.mxu0
        %402 = vmatpush.bf16.xpose.msra.mxu0 0
        %403 = vmatpush.bf16.xpose.msra.mxu0 0
        %404 = vmatpush.bf16.xpose.msra.mxu0 0
        %405 = vmatpush.bf16.xpose.msra.mxu0 0
        %406 = vmatpush.bf16.xpose.msra.mxu0 0
        %407 = vmatpush.bf16.xpose.msra.mxu0 0
        %408 = vmatpush.bf16.xpose.msra.mxu0 0
        %409 = vmatpush.bf16.xpose.msra.mxu0 %v362
        %410 = vmatmul.bf16.gmra.mxu0 %v354
        %v411 = vpop.f32.mrf.mxu0
        %v412 = vadd.f32 0.0, %v411
        %v413 = vpop.f32.mrf.mxu0
        %414 = vdwg.mxu0
        %v415 = vmul.f32 %v373, 0.088388346
        %v416 = vmul.f32 %v386, 0.088388346
        %v417 = vmul.f32 %v399, 0.088388346
        %v418 = vmul.f32 %v412, 0.088388346
        %v419 = vld [vmem:[%s342] sm:$0xff]
        %v420 = vld [vmem:[%s342 + $0x8] sm:$0xff]
        %v421 = vld [vmem:[%s342 + $0x10] sm:$0xff]
        %v422 = vld [vmem:[%s342 + $0x18] sm:$0xff]
        %v423 = vadd.f32 %v415, %v419
        %v424 = vadd.f32 %v416, %v420
        %v425 = vadd.f32 %v417, %v421
        %v426 = vadd.f32 %v418, %v422
        %vm427 = vcmask 64512
        %v428 = vsel %vm427, %v423, -inf
        %429 = vmax.xlane.f32.xlu0 %v428
        %v430 = vpop.xlane.xlu0 %429
        %v431 = vsel %vm427, %v424, -inf
        %432 = vmax.xlane.f32.xlu0 %v431
        %v433 = vpop.xlane.xlu0 %432
        %v434 = vsel %vm427, %v425, -inf
        %435 = vmax.xlane.f32.xlu0 %v434
        %v436 = vpop.xlane.xlu0 %435
        %v437 = vsel %vm427, %v426, -inf
        %438 = vmax.xlane.f32.xlu0 %v437
        %v439 = vpop.xlane.xlu0 %438
        %v440 = vsub.f32 %v423, %v430
        %v441 = vsub.f32 %v424, %v433
        %v442 = vsub.f32 %v425, %v436
        %v443 = vsub.f32 %v426, %v439
        %v444 = vmul.f32 %v440, 1.442695
        %v445 = vpow.pop %v444
        %v446 = vmul.f32 %v441, 1.442695
        %v447 = vpow.pop %v446
        %v448 = vmul.f32 %v442, 1.442695
        %v449 = vpow.pop %v448
        %v450 = vmul.f32 %v443, 1.442695
        %v451 = vpow.pop %v450
        %v452 = vsel %vm427, %v445, 0.0
        %453 = vadd.xlane.f32.xlu0 %v452
        %v454 = vpop.xlane.xlu0 %453
        %v455 = vsel %vm427, %v447, 0.0
        %456 = vadd.xlane.f32.xlu0 %v455
        %v457 = vpop.xlane.xlu0 %456
        %v458 = vsel %vm427, %v449, 0.0
        %459 = vadd.xlane.f32.xlu0 %v458
        %v460 = vpop.xlane.xlu0 %459
        %v461 = vsel %vm427, %v451, 0.0
        %462 = vadd.xlane.f32.xlu0 %v461
        %v463 = vpop.xlane.xlu0 %462
        %v464 = vrcp.pop %v454
        %v465 = vmul.f32 %v454, %v464
        %v466 = vsub.f32 1.0, %v465
        %v467 = vmul.f32 %v464, %v466
        %v468 = vadd.f32 %v464, %v467
        %vm469 = vweird.f32 %v454
        %vm470 = vweird.f32 %v464
        %vm471 = vmor %vm469, %vm470
        %v472 = vsel %vm471, %v464, %v468
        %v473 = vand.u32 2147483647, %v454
        %vm474 = vcmp.eq.f32.partialorder %v473, 8.507059e+37
        %v475 = vand.u32 %v454, 2147483648
        %v476 = vor.u32 1.1754944e-38, %v475
        %v477 = vsel %vm474, %v476, %v472
        %v478 = vmul.f32 %v445, %v477
        %v479 = vrcp.pop %v457
        %v480 = vmul.f32 %v457, %v479
        %v481 = vsub.f32 1.0, %v480
        %v482 = vmul.f32 %v479, %v481
        %v483 = vadd.f32 %v479, %v482
        %vm484 = vweird.f32 %v457
        %vm485 = vweird.f32 %v479
        %vm486 = vmor %vm484, %vm485
        %v487 = vsel %vm486, %v479, %v483
        %v488 = vand.u32 2147483647, %v457
        %vm489 = vcmp.eq.f32.partialorder %v488, 8.507059e+37
        %v490 = vand.u32 %v457, 2147483648
        %v491 = vor.u32 1.1754944e-38, %v490
        %v492 = vsel %vm489, %v491, %v487
        %v493 = vmul.f32 %v447, %v492
        %v494 = vrcp.pop %v460
        %v495 = vmul.f32 %v460, %v494
        %v496 = vsub.f32 1.0, %v495
        %v497 = vmul.f32 %v494, %v496
        %v498 = vadd.f32 %v494, %v497
        %vm499 = vweird.f32 %v460
        %vm500 = vweird.f32 %v494
        %vm501 = vmor %vm499, %vm500
        %v502 = vsel %vm501, %v494, %v498
        %v503 = vand.u32 2147483647, %v460
        %vm504 = vcmp.eq.f32.partialorder %v503, 8.507059e+37
        %v505 = vand.u32 %v460, 2147483648
        %v506 = vor.u32 1.1754944e-38, %v505
        %v507 = vsel %vm504, %v506, %v502
        %v508 = vmul.f32 %v449, %v507
        %v509 = vrcp.pop %v463
        %v510 = vmul.f32 %v463, %v509
        %v511 = vsub.f32 1.0, %v510
        %v512 = vmul.f32 %v509, %v511
        %v513 = vadd.f32 %v509, %v512
        %vm514 = vweird.f32 %v463
        %vm515 = vweird.f32 %v509
        %vm516 = vmor %vm514, %vm515
        %v517 = vsel %vm516, %v509, %v513
        %v518 = vand.u32 2147483647, %v463
        %vm519 = vcmp.eq.f32.partialorder %v518, 8.507059e+37
        %v520 = vand.u32 %v463, 2147483648
        %v521 = vor.u32 1.1754944e-38, %v520
        %v522 = vsel %vm519, %v521, %v517
        %v523 = vmul.f32 %v451, %v522
        %524 = vst.msk [vmem:[%s329] sm:$0xff] %vm427, %v478
        %525 = vst.msk [vmem:[%s329 + $0x8] sm:$0xff] %vm427, %v493
        %526 = vst.msk [vmem:[%s329 + $0x10] sm:$0xff] %vm427, %v508
        %527 = vst.msk [vmem:[%s329 + $0x18] sm:$0xff] %vm427, %v523
        %v528 = vpack.c.bf16 %v478, %v478
        %v529 = vpack.c.bf16 %v493, %v493
        %v530 = vpack.c.bf16 %v508, %v508
        %v531 = vpack.c.bf16 %v523, %v523
        %v532 = vld [vmem:[%s282] sm:$0xff]
        %v533 = vld [vmem:[%s282 + $0x8] sm:$0xff]
        %v534 = vld [vmem:[%s282 + $0x10] sm:$0xff]
        %v535 = vld [vmem:[%s282 + $0x18] sm:$0xff]
        %v536 = vpack.c.bf16 %v532, %v532
        %v537 = vpack.c.bf16 %v533, %v533
        %v538 = vpack.c.bf16 %v534, %v534
        %v539 = vpack.c.bf16 %v535, %v535
        %v541 = vsel %vm427, %v528, 0
        %vm543 = vcmask 1043456
        %v545 = vsel %vm543, %v536, 0
        %547 = vmatpush.bf16.msra.mxu0 0
        %548 = vmatpush.bf16.msra.mxu0 0
        %549 = vmatpush.bf16.msra.mxu0 0
        %550 = vmatpush.bf16.msra.mxu0 0
        %551 = vmatpush.bf16.msra.mxu0 0
        %552 = vmatpush.bf16.msra.mxu0 0
        %553 = vmatpush.bf16.msra.mxu0 0
        %554 = vmatpush.bf16.msra.mxu0 %v545
        %555 = vmatmul.bf16.gmra.mxu0 %v541
        %v556 = vpop.f32.mrf.mxu0
        %v557 = vadd.f32 0.0, %v556
        %v558 = vpop.f32.mrf.mxu0
        %559 = vdwg.mxu0
        %v561 = vsel %vm427, %v529, 0
        %v564 = vsel %vm543, %v537, 0
        %566 = vmatpush.bf16.msra.mxu0 0
        %567 = vmatpush.bf16.msra.mxu0 0
        %568 = vmatpush.bf16.msra.mxu0 0
        %569 = vmatpush.bf16.msra.mxu0 0
        %570 = vmatpush.bf16.msra.mxu0 0
        %571 = vmatpush.bf16.msra.mxu0 0
        %572 = vmatpush.bf16.msra.mxu0 0
        %573 = vmatpush.bf16.msra.mxu0 %v564
        %574 = vmatmul.bf16.gmra.mxu0 %v561
        %v575 = vpop.f32.mrf.mxu0
        %v576 = vadd.f32 0.0, %v575
        %v577 = vpop.f32.mrf.mxu0
        %578 = vdwg.mxu0
        %v580 = vsel %vm427, %v530, 0
        %v583 = vsel %vm543, %v538, 0
        %585 = vmatpush.bf16.msra.mxu0 0
        %586 = vmatpush.bf16.msra.mxu0 0
        %587 = vmatpush.bf16.msra.mxu0 0
        %588 = vmatpush.bf16.msra.mxu0 0
        %589 = vmatpush.bf16.msra.mxu0 0
        %590 = vmatpush.bf16.msra.mxu0 0
        %591 = vmatpush.bf16.msra.mxu0 0
        %592 = vmatpush.bf16.msra.mxu0 %v583
        %593 = vmatmul.bf16.gmra.mxu0 %v580
        %v594 = vpop.f32.mrf.mxu0
        %v595 = vadd.f32 0.0, %v594
        %v596 = vpop.f32.mrf.mxu0
        %597 = vdwg.mxu0
        %v599 = vsel %vm427, %v531, 0
        %v602 = vsel %vm543, %v539, 0
        %604 = vmatpush.bf16.msra.mxu0 0
        %605 = vmatpush.bf16.msra.mxu0 0
        %606 = vmatpush.bf16.msra.mxu0 0
        %607 = vmatpush.bf16.msra.mxu0 0
        %608 = vmatpush.bf16.msra.mxu0 0
        %609 = vmatpush.bf16.msra.mxu0 0
        %610 = vmatpush.bf16.msra.mxu0 0
        %611 = vmatpush.bf16.msra.mxu0 %v602
        %612 = vmatmul.bf16.gmra.mxu0 %v599
        %v613 = vpop.f32.mrf.mxu0
        %v614 = vadd.f32 0.0, %v613
        %v615 = vpop.f32.mrf.mxu0
        %616 = vdwg.mxu0
        %617 = vst [vmem:[%s322] sm:$0xff] %v557
        %618 = vst [vmem:[%s322 + $0x8] sm:$0xff] %v576
        %619 = vst [vmem:[%s322 + $0x10] sm:$0xff] %v595
        %620 = vst [vmem:[%s322 + $0x18] sm:$0xff] %v614
        %s621 = sand.u32 %s141, 1
        %s622 = scalar_lea.sflag [#allocation4], %s621
        %s623 = sand.u32 %s141, 1
        %s624 = smul.addr %s623, 32
        %s625 = scalar_lea.vmem [#allocation7], %s624
        %s626 = sand.u32 %s167, 1
        %s627 = scalar_lea.sflag [#allocation9], %s626
        %s628 = sand.u32 %s167, 1
        %s629 = smul.addr %s628, 32
        %s630 = scalar_lea.vmem [#allocation8], %s629
        // Predicated region
        $region45: #{_lambda_.1} parent=35 // pred_check
          %p631 = pneg %p151
        $region46: #{_lambda_.1} parent=35 // pred_check_branch
          %633 = sbr.rel (%p631) target = $region48
        $region47: #{_lambda_.1} parent=35 // pred_region
          %s634 = smul.u32 4, %s29
          %636 = vsyncadd %s622, 0
          %s637 = smul.addr %s634, 8
          %s638 = scalar_lea.hbm %s4, %s637
          %s639 = sshll.u32 %s625, 4
          %s640 = int_to_ptr.vmem [resolvable:$true] %s639
          %s641 = sshll.u32 %s638, 4
          %s642 = int_to_ptr.hbm [resolvable:$true] %s641
          %647 = dma.vmem_to_hbm [thread:$0]  %s640, 512, %s642, %s622, 128, 128, 8
        $region48: #{_lambda_.1} parent=35 // pred_fallthru
          _
        // Predicated region
        $region49: #{_lambda_.1} parent=35 // pred_check
          %p648 = pneg %p177
        $region50: #{_lambda_.1} parent=35 // pred_check_branch
          %650 = sbr.rel (%p648) target = $region52
        $region51: #{_lambda_.1} parent=35 // pred_region
          %s651 = smul.u32 4, %s29
          %653 = vsyncadd %s627, 0
          %s654 = smul.addr %s651, 8
          %s655 = scalar_lea.hbm %s5, %s654
          %s656 = sshll.u32 %s630, 4
          %s657 = int_to_ptr.vmem [resolvable:$true] %s656
          %s658 = sshll.u32 %s655, 4
          %s659 = int_to_ptr.hbm [resolvable:$true] %s658
          %664 = dma.vmem_to_hbm [thread:$0]  %s657, 512, %s659, %s627, 128, 128, 8
        $region52: #{_lambda_.1} parent=35 // pred_fallthru
          _
      $region36: #{_lambda_.1} parent=5 // pred_fallthru
        _
      %p665 = scmp.le.s32.totalorder 2, %s24
      // Predicated region
      $region53: #{_lambda_.1} parent=5 // pred_check
        %p666 = pneg %p665
      $region54: #{_lambda_.1} parent=5 // pred_check_branch
        %668 = sbr.rel (%p666) target = $region56
      $region55: #{_lambda_.1} parent=5 // pred_region
        %s669 = ssub.s32 %s24, 2
        // Predicated region
        $region57: #{_lambda_.1} parent=55 // pred_check
          %p670 = pneg %p157
        $region58: #{_lambda_.1} parent=55 // pred_check_branch
          %672 = sbr.rel (%p670) target = $region60
        $region59: #{_lambda_.1} parent=55 // pred_region
          %s673 = sand.u32 %s142, 1
          %s674 = scalar_lea.sflag [#allocation4], %s673
          %s675 = sand.u32 %s142, 1
          %s676 = smul.addr %s675, 32
          %s677 = scalar_lea.vmem [#allocation7], %s676
          %679 = dma.done %s674, 512
        $region60: #{_lambda_.1} parent=55 // pred_fallthru
          _
        // Predicated region
        $region61: #{_lambda_.1} parent=55 // pred_check
          %p680 = pneg %p183
        $region62: #{_lambda_.1} parent=55 // pred_check_branch
          %682 = sbr.rel (%p680) target = $region64
        $region63: #{_lambda_.1} parent=55 // pred_region
          %s683 = sand.u32 %s168, 1
          %s684 = scalar_lea.sflag [#allocation9], %s683
          %s685 = sand.u32 %s168, 1
          %s686 = smul.addr %s685, 32
          %s687 = scalar_lea.vmem [#allocation8], %s686
          %689 = dma.done %s684, 512
        $region64: #{_lambda_.1} parent=55 // pred_fallthru
          _
      $region56: #{_lambda_.1} parent=5 // pred_fallthru
        _
    $region6: #{_lambda_.1} parent=1 // loop_footer
      %s28 = sadd.s32 1, %s24
    $region7: #{_lambda_.1} parent=1 // loop_footer_branch
      %23 = sbr.rel target = $region3
    $region8: #{_lambda_.1} parent=1 // loop_exit
      _
    %690 = vsyncpa [#allocation3], 1
    %s691 = scalar_lea.sflag [#allocation3], 1
    %692 = vsyncpa %s691, 1
    %693 = vsyncpa [#allocation6], 1
    %s694 = scalar_lea.sflag [#allocation6], 1
    %695 = vsyncpa %s694, 1
    %696 = vsyncpa [#allocation4], 1
    %s697 = scalar_lea.sflag [#allocation4], 1
    %698 = vsyncpa %s697, 1
    %699 = vsyncpa [#allocation9], 1
    %s700 = scalar_lea.sflag [#allocation9], 1
    %701 = vsyncpa %s700, 1

</llo_original>
